<compile_context>
chip_gen: v5e
topology: v5e:2x2
jax: 0.10.0
libtpu: 0.0.40
codegen_flags: <defaults>
</compile_context>

<pallas_src>
import functools

import jax
import jax.numpy as jnp
from jax.experimental import pallas as pl
from jax.experimental.pallas import tpu as pltpu


DEFAULT_MXU_DTYPE = jnp.bfloat16     # bf16 weights: native MXU rate, half HBM/VMEM.


def _cdiv(a, b):
    return -(-a // b)


def _round_up(x, m):
    return m * _cdiv(x, m)


# --------------------------------------------------------------------------- #
# Kernel
# --------------------------------------------------------------------------- #
def _attn_kernel(vt_ref, mv_ref, w1t_ref, b1_ref, w2t_ref, b2_ref,
                 w3_ref, b3_ref, vatt_ref, wts_ref, *, n_regions):
    Bb, Rp, Dp = vt_ref.shape
    Ep = w1t_ref.shape[1]
    mxu_dt = w1t_ref.dtype

    vt = vt_ref[...]                                    # (Bb, Rp, Dp)
    # Rp is a multiple of 8 (wrapper guarantees it), so merging the leading
    # dims is a pure view -- no sublane relayout / VMEM copy per grid step.
    vt2 = vt.reshape(Bb * Rp, Dp)

    # embedding_1: fc1 -> tanh  (one (Bb*Rp, Dp) @ (Dp, Ep) matmul, f32 acc).
    W_v = jnp.tanh(
        jnp.dot(vt2.astype(mxu_dt), w1t_ref[...],
                preferred_element_type=jnp.float32)
        + b1_ref[...])                                  # (Bb*Rp, Ep)

    # embedding_2: fc2 -> tanh  (batched over the block: M = Bb rows).
    W_v_m = jnp.tanh(
        jnp.dot(mv_ref[...].astype(mxu_dt), w2t_ref[...],
                preferred_element_type=jnp.float32)
        + b2_ref[...])                                  # (Bb, Ep)

    # embedding_3 folded: a_v = tanh( sum_e W_v * (W_v_m * w3) + b3 )
    # -> the (Rp, Ep) h_v temporary is never materialised in HBM.
    scaled = W_v_m * w3_ref[...]                        # (Bb, Ep)
    prod = W_v.reshape(Bb, Rp, Ep) * scaled[:, None, :] # (Bb, Rp, Ep)
    logits = jnp.sum(prod, axis=-1) + b3_ref[0]         # (Bb, Rp)
    a_v = jnp.tanh(logits)

    if n_regions != Rp:                                 # static Python branch
        region = jax.lax.broadcasted_iota(jnp.int32, (Bb, Rp), 1)
        a_v = jnp.where(region < n_regions, a_v, jnp.float32(-1e30))

    # softmax over regions (lane axis -> lane-wise max/sum).
    m = jnp.max(a_v, axis=-1, keepdims=True)
    e = jnp.exp(a_v - m)
    denom = jnp.sum(e, axis=-1, keepdims=True)
    w = e * pl.reciprocal(denom, approx=True)           # (Bb, Rp)
    wts_ref[...] = w

    # attention-weighted sum over regions, then l2 norm over features (f32).
    v_att = jnp.sum(w[:, :, None] * vt.astype(jnp.float32), axis=1)  # (Bb, Dp)
    ssq = jnp.sum(v_att * v_att, axis=-1, keepdims=True)
    # NOTE: matches the PyTorch reference (no epsilon) -> NaN only if a row is 0.
    vatt_ref[...] = v_att * jax.lax.rsqrt(ssq)


# --------------------------------------------------------------------------- #
# Hardware caps (generation-aware VMEM / TensorCore-count heuristics)
# --------------------------------------------------------------------------- #
def _tpu_caps():
    """Returns (vmem_capacity_bytes, has_two_tensorcores) with safe fallbacks."""
    vmem_cap = 64 << 20            # conservative: v7x physical per-TC VMEM
    two_cores = False
    try:
        info = pltpu.get_tpu_info()
        vmem_cap = int(getattr(info, "vmem_capacity_bytes", vmem_cap))
    except Exception:
        pass
    try:
        kind = jax.devices()[0].device_kind.lower()
        two_cores = "v7" in kind   # v7x: 2 TensorCores per chip
    except Exception:
        pass
    return vmem_cap, two_cores


# --------------------------------------------------------------------------- #
# One-time weight preprocessing (hoisted out of the per-call hot path)
# --------------------------------------------------------------------------- #
def prepare_params(params, *, mxu_dtype=DEFAULT_MXU_DTYPE):
    if isinstance(params, dict) and params.get("_prepared", False):
        return params
    w1 = jnp.asarray(params["w1"], jnp.float32)         # (E, D)
    w2 = jnp.asarray(params["w2"], jnp.float32)         # (E, D)
    E, D = w1.shape
    D_pad, E_pad = _round_up(D, 128), _round_up(E, 128)

    def pad2(x, r, c):
        return jnp.pad(x, ((0, r - x.shape[0]), (0, c - x.shape[1])))

    # Cast first, then zero-pad, so padded rows/cols stay exactly zero.
    return {
        "_prepared": True, "D": D, "E": E, "D_pad": D_pad, "E_pad": E_pad,
        "mxu_dtype": jnp.dtype(mxu_dtype),
        "w1t": pad2(w1.T.astype(mxu_dtype), D_pad, E_pad),       # (D_pad, E_pad)
        "w2t": pad2(w2.T.astype(mxu_dtype), D_pad, E_pad),       # (D_pad, E_pad)
        "b1": pad2(jnp.asarray(params["b1"], jnp.float32).reshape(1, E), 1, E_pad),
        "b2": pad2(jnp.asarray(params["b2"], jnp.float32).reshape(1, E), 1, E_pad),
        "w3": pad2(jnp.asarray(params["w3"], jnp.float32).reshape(1, E), 1, E_pad),
        "b3": jnp.asarray(params["b3"], jnp.float32).reshape(1),
    }


# --------------------------------------------------------------------------- #
# Wrapper
# --------------------------------------------------------------------------- #
def v_single_modal_atten(v_t, m_v, params, *, b_blk=None,
                         mxu_dtype=DEFAULT_MXU_DTYPE, act_dtype=jnp.float32):
    """v_t: (B, R, D), m_v: (B, D) -> (v_att (B, D), weights (B, R))."""
    params = prepare_params(params, mxu_dtype=mxu_dtype)
    D, E = params["D"], params["E"]
    D_pad, E_pad = params["D_pad"], params["E_pad"]
    w_dt = params["mxu_dtype"]

    # The reference module casts inputs to f32; act_dtype=bf16 is an optional
    # HBM-traffic saver for mem-bound v6e deployments.
    v_t = jnp.asarray(v_t, jnp.float32).astype(act_dtype)
    m_v = jnp.asarray(m_v, jnp.float32).astype(act_dtype)
    B, R, Dv = v_t.shape
    assert Dv == D, "v_t feature dim must match fc1 in_features"
    # TODO(synk): fc2_2 branch (m_v.shape[-1] == embed_dim) not implemented.
    assert m_v.shape[-1] == D, "only the m_v.shape[-1] == image_dim branch is implemented"

    R_pad = _round_up(R, 8)          # keep the in-kernel reshape relayout-free
    vmem_cap, two_cores = _tpu_caps()

    # ---- batch-block selection ------------------------------------------- #
    if b_blk is None:
        b_blk = max(1, _cdiv(256, R_pad))        # ~256 rows in the fc1 matmul
        b_blk = _round_up(b_blk, 8)
        b_blk = min(b_blk, _round_up(B, 8))
        if two_cores and _cdiv(B, b_blk) < 2 and b_blk > 8:
            b_blk = max(8, _round_up(b_blk // 2, 8))   # give both v7x TCs work
        if B % b_blk != 0:
            # prefer a divisor of B (multiple of 8 sublanes) -> no batch pad copy
            divs = [c for c in range(8, min(b_blk, B) + 1, 8) if B % c == 0]
            if divs:
                b_blk = divs[-1]

    # ---- VMEM budgeting (generation-aware) -------------------------------- #
    act_bytes = jnp.dtype(act_dtype).itemsize
    w_bytes = w_dt.itemsize

    def vmem_footprint(bb):
        weights = 2 * D_pad * E_pad * w_bytes + 3 * E_pad * 4
        blocks = bb * (R_pad * D_pad * act_bytes + D_pad * act_bytes    # inputs
                       + D_pad * 4 + R_pad * 4)                         # outputs
        temps = bb * R_pad * E_pad * 4 + bb * E_pad * 4                 # W_v / W_v_m
        return 2 * (weights + blocks) + temps + (2 << 20)               # 2x double-buffer

    budget = int(0.75 * vmem_cap)
    while vmem_footprint(b_blk) > budget and b_blk > 8:
        b_blk = max(8, _round_up(b_blk // 2, 8))

    n_blk = _cdiv(B, b_blk)
    B_pad = n_blk * b_blk

    vmem_needed = vmem_footprint(b_blk)
    # v5e's default scoped limit is 16 MiB (32 MiB on v6e/v7x): raise it whenever
    # the footprint can exceed that, but stay well under physical VMEM.
    vmem_limit = (int(min(vmem_needed, int(0.9 * vmem_cap)))
                  if vmem_needed > (16 << 20) else None)

    # ---- activation padding (only when actually needed) -------------------- #
    if (B_pad, R_pad, D_pad) != (B, R, D):
        vt_p = jnp.pad(v_t, ((0, B_pad - B), (0, R_pad - R), (0, D_pad - D)))
    else:
        vt_p = v_t
    if (B_pad, D_pad) != (B, D):
        mv_p = jnp.pad(m_v, ((0, B_pad - B), (0, D_pad - D)))
    else:
        mv_p = m_v

    # ---- advisory cost estimate for the XLA scheduler ---------------------- #
    flops = (2 * B_pad * R_pad * D_pad * E_pad      # fc1
             + 2 * B_pad * D_pad * E_pad            # fc2
             + 2 * B_pad * R_pad * E_pad            # folded fc3
             + 2 * B_pad * R_pad * D_pad)           # weighted region sum
    transcendentals = (B_pad * R_pad * E_pad + B_pad * E_pad    # tanh
                       + 2 * B_pad * R_pad                      # tanh + exp
                       + 2 * B_pad)                             # recip + rsqrt
    bytes_accessed = (act_bytes * (B_pad * R_pad * D_pad + B_pad * D_pad)
                      + 4 * (B_pad * D_pad + B_pad * R_pad)
                      + 2 * D_pad * E_pad * w_bytes + 4 * (3 * E_pad + 1))

    full2 = lambda r, c: pl.BlockSpec((r, c), lambda i: (0, 0))
    kernel = functools.partial(_attn_kernel, n_regions=R)

    v_att, wts = pl.pallas_call(
        kernel,
        out_shape=(
            jax.ShapeDtypeStruct((B_pad, D_pad), jnp.float32),
            jax.ShapeDtypeStruct((B_pad, R_pad), jnp.float32),
        ),
        grid_spec=pl.GridSpec(
            grid=(n_blk,),
            in_specs=[
                pl.BlockSpec((b_blk, R_pad, D_pad), lambda i: (i, 0, 0)),  # v_t
                pl.BlockSpec((b_blk, D_pad), lambda i: (i, 0)),            # m_v
                full2(D_pad, E_pad),                                       # w1^T
                full2(1, E_pad),                                           # b1
                full2(D_pad, E_pad),                                       # w2^T
                full2(1, E_pad),                                           # b2
                full2(1, E_pad),                                           # w3 row
                pl.BlockSpec(memory_space=pltpu.MemorySpace.SMEM),         # b3 scalar
            ],
            out_specs=[
                pl.BlockSpec((b_blk, D_pad), lambda i: (i, 0)),            # v_att
                pl.BlockSpec((b_blk, R_pad), lambda i: (i, 0)),            # weights
            ],
        ),
        compiler_params=pltpu.CompilerParams(
            dimension_semantics=("parallel",),
            vmem_limit_bytes=vmem_limit),
        cost_estimate=pl.CostEstimate(
            flops=flops, transcendentals=transcendentals,
            bytes_accessed=bytes_accessed),
    )(vt_p, mv_p, params["w1t"], params["b1"], params["w2t"], params["b2"],
      params["w3"], params["b3"])

    return v_att[:B, :D], wts[:B, :R]


# --------------------------------------------------------------------------- #
# Pure-JAX reference (optionally mimicking the bf16 MXU operand cast)
# --------------------------------------------------------------------------- #
def _reference(v_t, m_v, p, mxu_dtype=jnp.float32):
    cast = lambda x: x.astype(mxu_dtype).astype(jnp.float32)
    W_v = jnp.tanh(jnp.einsum('brd,ed->bre', cast(v_t), cast(p["w1"])) + p["b1"])
    W_v_m = jnp.tanh(cast(m_v) @ cast(p["w2"]).T + p["b2"])
    h_v = W_v * W_v_m[:, None, :]
    a_v = jnp.tanh(h_v @ p["w3"].T + p["b3"])[..., 0]
    weights = jax.nn.softmax(a_v, axis=1)
    v_att = (weights[..., None] * v_t).sum(axis=1)
    v_att = v_att / jnp.sqrt((v_att ** 2).sum(axis=-1, keepdims=True))
    return v_att, weights


if __name__ == "__main__":
    B, R, D, E = 16, 8, 32, 32   # batch, img_region_num, image_dim, embed_dim

    key = jax.random.PRNGKey(0)
    k = jax.random.split(key, 8)
    params = {
        "w1": 0.1 * jax.random.normal(k[0], (E, D), jnp.float32),
        "b1": 0.1 * jax.random.normal(k[1], (E,), jnp.float32),
        "w2": 0.1 * jax.random.normal(k[2], (E, D), jnp.float32),
        "b2": 0.1 * jax.random.normal(k[3], (E,), jnp.float32),
        "w3": 0.1 * jax.random.normal(k[4], (1, E), jnp.float32),
        "b3": 0.1 * jax.random.normal(k[5], (1,), jnp.float32),
    }
    v_t = jax.random.normal(k[6], (B, R, D), jnp.float32)
    m_v = jax.random.normal(k[7], (B, D), jnp.float32)

    prepared = prepare_params(params)            # one-time weight prep (bf16)
    v_att, weights = v_single_modal_atten(v_t, m_v, prepared)
    jax.block_until_ready((v_att, weights))

    # Tight check against a reference that mimics the bf16 MXU operand cast
    # (f32 accumulation); tolerances also cover the approx EUP recip/rsqrt.
    v_att_q, weights_q = _reference(v_t, m_v, params, mxu_dtype=jnp.bfloat16)
    assert jnp.allclose(v_att, v_att_q, atol=5e-3, rtol=5e-3), "v_att mismatch (bf16 ref)"
    assert jnp.allclose(weights, weights_q, atol=5e-3, rtol=5e-3), "weights mismatch (bf16 ref)"

    # Looser check against the strict-f32 module semantics.
    v_att_f, weights_f = _reference(v_t, m_v, params)
    assert jnp.allclose(v_att, v_att_f, atol=3e-2, rtol=3e-2), "v_att mismatch (f32 ref)"
    assert jnp.allclose(weights, weights_f, atol=3e-2, rtol=3e-2), "weights mismatch (f32 ref)"

    print("KERNEL_OK")
</pallas_src>

<mosaic_0001>
module attributes {stable_mosaic.version = 11 : i64} {
  func.func @_attn_kernel(%arg0: i32, %arg1: memref<16x8x128xf32, #tpu.memory_space<vmem>>, %arg2: memref<16x128xf32, #tpu.memory_space<vmem>>, %arg3: memref<128x128xbf16, #tpu.memory_space<vmem>>, %arg4: memref<1x128xf32, #tpu.memory_space<vmem>>, %arg5: memref<128x128xbf16, #tpu.memory_space<vmem>>, %arg6: memref<1x128xf32, #tpu.memory_space<vmem>>, %arg7: memref<1x128xf32, #tpu.memory_space<vmem>>, %arg8: memref<1xf32, #tpu.memory_space<smem>>, %arg9: memref<16x128xf32, #tpu.memory_space<vmem>>, %arg10: memref<16x8xf32, #tpu.memory_space<vmem>>) attributes {dimension_semantics = [#tpu.dimension_semantics<parallel>], iteration_bounds = array<i64: 1>, scalar_prefetch = 0 : i64, scratch_operands = 0 : i64, tpu.core_type = #tpu.core_type<tc>, window_params = [{transform_indices = @transform_0, window_bounds = array<i64: 16, 8, 128>}, {transform_indices = @transform_1, window_bounds = array<i64: 16, 128>}, {pipeline_mode = #tpu.pipeline_mode<synchronous>, transform_indices = @transform_2, window_bounds = array<i64: 128, 128>}, {pipeline_mode = #tpu.pipeline_mode<synchronous>, transform_indices = @transform_3, window_bounds = array<i64: 1, 128>}, {pipeline_mode = #tpu.pipeline_mode<synchronous>, transform_indices = @transform_4, window_bounds = array<i64: 128, 128>}, {pipeline_mode = #tpu.pipeline_mode<synchronous>, transform_indices = @transform_5, window_bounds = array<i64: 1, 128>}, {pipeline_mode = #tpu.pipeline_mode<synchronous>, transform_indices = @transform_6, window_bounds = array<i64: 1, 128>}, {transform_indices = @transform_7, window_bounds = array<i64: 1>}, {transform_indices = @transform_8, window_bounds = array<i64: 16, 128>}, {transform_indices = @transform_9, window_bounds = array<i64: 16, 8>}]} {
    %c0 = arith.constant 0 : index
    %c0_0 = arith.constant 0 : index
    %c0_1 = arith.constant 0 : index
    %0 = vector.load %arg1[%c0, %c0_0, %c0_1] : memref<16x8x128xf32, #tpu.memory_space<vmem>>, vector<16x8x128xf32>
    %1 = vector.shape_cast %0 : vector<16x8x128xf32> to vector<128x128xf32>
    %2 = arith.truncf %1 : vector<128x128xf32> to vector<128x128xbf16>
    %c0_2 = arith.constant 0 : index
    %c0_3 = arith.constant 0 : index
    %3 = vector.load %arg3[%c0_2, %c0_3] : memref<128x128xbf16, #tpu.memory_space<vmem>>, vector<128x128xbf16>
    %cst = arith.constant dense<0.000000e+00> : vector<128x128xf32>
    %4 = tpu.matmul %2, %3, %cst {dimension_numbers = #tpu.dot_dimension_numbers<[1], [0], [0], [1], [0, 0, 1, 1], [], []>} : vector<128x128xbf16>, vector<128x128xbf16>, vector<128x128xf32> -> vector<128x128xf32>
    %c0_4 = arith.constant 0 : index
    %c0_5 = arith.constant 0 : index
    %5 = vector.load %arg4[%c0_4, %c0_5] : memref<1x128xf32, #tpu.memory_space<vmem>>, vector<1x128xf32>
    %6 = vector.broadcast %5 : vector<1x128xf32> to vector<128x128xf32>
    %7 = arith.addf %4, %6 : vector<128x128xf32>
    %8 = math.tanh %7 : vector<128x128xf32>
    %c0_6 = arith.constant 0 : index
    %c0_7 = arith.constant 0 : index
    %9 = vector.load %arg2[%c0_6, %c0_7] : memref<16x128xf32, #tpu.memory_space<vmem>>, vector<16x128xf32>
    %10 = arith.truncf %9 : vector<16x128xf32> to vector<16x128xbf16>
    %c0_8 = arith.constant 0 : index
    %c0_9 = arith.constant 0 : index
    %11 = vector.load %arg5[%c0_8, %c0_9] : memref<128x128xbf16, #tpu.memory_space<vmem>>, vector<128x128xbf16>
    %cst_10 = arith.constant dense<0.000000e+00> : vector<16x128xf32>
    %12 = tpu.matmul %10, %11, %cst_10 {dimension_numbers = #tpu.dot_dimension_numbers<[1], [0], [0], [1], [0, 0, 1, 1], [], []>} : vector<16x128xbf16>, vector<128x128xbf16>, vector<16x128xf32> -> vector<16x128xf32>
    %c0_11 = arith.constant 0 : index
    %c0_12 = arith.constant 0 : index
    %13 = vector.load %arg6[%c0_11, %c0_12] : memref<1x128xf32, #tpu.memory_space<vmem>>, vector<1x128xf32>
    %14 = vector.broadcast %13 : vector<1x128xf32> to vector<16x128xf32>
    %15 = arith.addf %12, %14 : vector<16x128xf32>
    %16 = math.tanh %15 : vector<16x128xf32>
    %c0_13 = arith.constant 0 : index
    %c0_14 = arith.constant 0 : index
    %17 = vector.load %arg7[%c0_13, %c0_14] : memref<1x128xf32, #tpu.memory_space<vmem>>, vector<1x128xf32>
    %18 = vector.broadcast %17 : vector<1x128xf32> to vector<16x128xf32>
    %19 = arith.mulf %16, %18 : vector<16x128xf32>
    %20 = vector.shape_cast %8 : vector<128x128xf32> to vector<16x8x128xf32>
    %21 = vector.shape_cast %19 : vector<16x128xf32> to vector<16x1x128xf32>
    %22 = vector.broadcast %21 : vector<16x1x128xf32> to vector<16x8x128xf32>
    %23 = arith.mulf %20, %22 : vector<16x8x128xf32>
    %cst_15 = arith.constant dense<0.000000e+00> : vector<16x8xf32>
    %24 = vector.multi_reduction <add>, %23, %cst_15 [2] : vector<16x8x128xf32> to vector<16x8xf32>
    %c0_16 = arith.constant 0 : index
    %25 = memref.load %arg8[%c0_16] : memref<1xf32, #tpu.memory_space<smem>>
    %26 = vector.broadcast %25 : f32 to vector<16x8xf32>
    %27 = arith.addf %24, %26 : vector<16x8xf32>
    %28 = math.tanh %27 : vector<16x8xf32>
    %cst_17 = arith.constant dense<0xFF800000> : vector<16xf32>
    %29 = vector.multi_reduction <maximumf>, %28, %cst_17 [1] : vector<16x8xf32> to vector<16xf32>
    %30 = vector.shape_cast %29 : vector<16xf32> to vector<16x1xf32>
    %31 = vector.broadcast %30 : vector<16x1xf32> to vector<16x8xf32>
    %32 = arith.subf %28, %31 : vector<16x8xf32>
    %33 = math.exp %32 : vector<16x8xf32>
    %cst_18 = arith.constant dense<0.000000e+00> : vector<16xf32>
    %34 = vector.multi_reduction <add>, %33, %cst_18 [1] : vector<16x8xf32> to vector<16xf32>
    %35 = vector.shape_cast %34 : vector<16xf32> to vector<16x1xf32>
    %36 = tpu.reciprocal %35 {approx = true} : vector<16x1xf32> -> vector<16x1xf32>
    %37 = vector.broadcast %36 : vector<16x1xf32> to vector<16x8xf32>
    %38 = arith.mulf %33, %37 : vector<16x8xf32>
    %c0_19 = arith.constant 0 : index
    %c0_20 = arith.constant 0 : index
    %39 = vector.load %arg10[%c0_19, %c0_20] : memref<16x8xf32, #tpu.memory_space<vmem>>, vector<16x8xf32>
    tpu.vector_store %arg10[%c0_19, %c0_20], %38 {strides = array<i32>} : memref<16x8xf32, #tpu.memory_space<vmem>>, vector<16x8xf32>,
    %40 = vector.shape_cast %38 : vector<16x8xf32> to vector<16x8x1xf32>
    %41 = vector.broadcast %40 : vector<16x8x1xf32> to vector<16x8x128xf32>
    %42 = arith.mulf %41, %0 : vector<16x8x128xf32>
    %cst_21 = arith.constant dense<0.000000e+00> : vector<16x128xf32>
    %43 = vector.multi_reduction <add>, %42, %cst_21 [1] : vector<16x8x128xf32> to vector<16x128xf32>
    %44 = arith.mulf %43, %43 : vector<16x128xf32>
    %cst_22 = arith.constant dense<0.000000e+00> : vector<16xf32>
    %45 = vector.multi_reduction <add>, %44, %cst_22 [1] : vector<16x128xf32> to vector<16xf32>
    %46 = vector.shape_cast %45 : vector<16xf32> to vector<16x1xf32>
    %47 = math.rsqrt %46 : vector<16x1xf32>
    %48 = vector.broadcast %47 : vector<16x1xf32> to vector<16x128xf32>
    %49 = arith.mulf %43, %48 : vector<16x128xf32>
    %c0_23 = arith.constant 0 : index
    %c0_24 = arith.constant 0 : index
    %50 = vector.load %arg9[%c0_23, %c0_24] : memref<16x128xf32, #tpu.memory_space<vmem>>, vector<16x128xf32>
    tpu.vector_store %arg9[%c0_23, %c0_24], %49 {strides = array<i32>} : memref<16x128xf32, #tpu.memory_space<vmem>>, vector<16x128xf32>,
    return
  }
  func.func @transform_0(%arg0: i32) -> (i32, i32, i32) {
    %c0_i32 = arith.constant 0 : i32
    %c0_i32_0 = arith.constant 0 : i32
    %c0_i32_1 = arith.constant 0 : i32
    return %arg0, %c0_i32, %c0_i32_0 : i32, i32, i32
  }
  func.func @transform_1(%arg0: i32) -> (i32, i32) {
    %c0_i32 = arith.constant 0 : i32
    %c0_i32_0 = arith.constant 0 : i32
    return %arg0, %c0_i32 : i32, i32
  }
  func.func @transform_2(%arg0: i32) -> (i32, i32) {
    %c0_i32 = arith.constant 0 : i32
    %c0_i32_0 = arith.constant 0 : i32
    %c0_i32_1 = arith.constant 0 : i32
    return %c0_i32, %c0_i32_0 : i32, i32
  }
  func.func @transform_3(%arg0: i32) -> (i32, i32) {
    %c0_i32 = arith.constant 0 : i32
    %c0_i32_0 = arith.constant 0 : i32
    %c0_i32_1 = arith.constant 0 : i32
    return %c0_i32, %c0_i32_0 : i32, i32
  }
  func.func @transform_4(%arg0: i32) -> (i32, i32) {
    %c0_i32 = arith.constant 0 : i32
    %c0_i32_0 = arith.constant 0 : i32
    %c0_i32_1 = arith.constant 0 : i32
    return %c0_i32, %c0_i32_0 : i32, i32
  }
  func.func @transform_5(%arg0: i32) -> (i32, i32) {
    %c0_i32 = arith.constant 0 : i32
    %c0_i32_0 = arith.constant 0 : i32
    %c0_i32_1 = arith.constant 0 : i32
    return %c0_i32, %c0_i32_0 : i32, i32
  }
  func.func @transform_6(%arg0: i32) -> (i32, i32) {
    %c0_i32 = arith.constant 0 : i32
    %c0_i32_0 = arith.constant 0 : i32
    %c0_i32_1 = arith.constant 0 : i32
    return %c0_i32, %c0_i32_0 : i32, i32
  }
  func.func @transform_7(%arg0: i32) -> i32 {
    %c0_i32 = arith.constant 0 : i32
    %c0_i32_0 = arith.constant 0 : i32
    return %c0_i32 : i32
  }
  func.func @transform_8(%arg0: i32) -> (i32, i32) {
    %c0_i32 = arith.constant 0 : i32
    %c0_i32_0 = arith.constant 0 : i32
    return %arg0, %c0_i32 : i32, i32
  }
  func.func @transform_9(%arg0: i32) -> (i32, i32) {
    %c0_i32 = arith.constant 0 : i32
    %c0_i32_0 = arith.constant 0 : i32
    return %arg0, %c0_i32 : i32, i32
  }
}

</mosaic_0001>

<llo_original>
// kernel: tpu_custom_call.1
$region0: #{tpu_custom_call.1}
  #allocation0 [shape = 'u32[]', space=smem, size = 0x4, offset = 0x4, fixed_abs, tag = 'smem constant byte address 0x4 - core index']
  #allocation1 [shape = 'u32[72,128]{1,0:T(1,128)}', space=vmem, size = 0x9000, scoped, tag = 'internal scratch']
  #allocation2 [shape = 'f32[1]{0:T(128)S(6)}', space=smem, size = 0x200, scoped, tag = 'scoped memory for tpu_custom_call.1']
  %s0 = inlined_call_operand.hbm [shape: f32[16,8,128], index: 0, kind: input, shape index: {}]
  %s1 = inlined_call_operand.hbm [shape: f32[16,128], index: 1, kind: input, shape index: {}]
  %s2 = inlined_call_operand.hbm [shape: bf16[128,128], index: 2, kind: input, shape index: {}]
  %s3 = inlined_call_operand.vmem [shape: f32[1,128], index: 3, kind: input, shape index: {}]
  %s4 = inlined_call_operand.hbm [shape: bf16[128,128], index: 4, kind: input, shape index: {}]
  %s5 = inlined_call_operand.vmem [shape: f32[1,128], index: 5, kind: input, shape index: {}]
  %s6 = inlined_call_operand.vmem [shape: f32[1,128], index: 6, kind: input, shape index: {}]
  %s7 = inlined_call_operand.<no memory space> [shape: f32[1], index: 7, kind: input, shape index: {}]
  %s8 = inlined_call_operand.hbm [shape: f32[16,128], index: 8, kind: output, shape index: {0}]
  %s9 = inlined_call_operand.vmem [shape: f32[16,8], index: 9, kind: output, shape index: {1}]
  %10 = xla_tuple %s8, %s9
  %s11 = sld [smem:[#allocation0]]
  $region66: #{tpu_custom_call.1} parent=0
    _
  %s13 = ssub.s32 1, %s11
  %s14 = scalar_select 0, %s13, %s11
  %15 = sst [smem:[#allocation2]] %s7
  $region1: #{tpu_custom_call.1} parent=0
    #allocation3 [shape = 'u8[65536]{0}', space=vmem, size = 0x10000, scoped, tag = 'input window, operand 0, single buffered']
    #allocation4 [shape = 's32[1]{0}', space=sflag, size = 0x4, scoped, tag = 'scoped memory for tpu_custom_call.1']
    #allocation5 [shape = 's32[1]{0}', space=sflag, size = 0x4, scoped, tag = 'scoped memory for tpu_custom_call.1']
    #allocation6 [shape = 'u8[8192]{0}', space=vmem, size = 0x2000, scoped, tag = 'input window, operand 1, single buffered']
    #allocation7 [shape = 's32[1]{0}', space=sflag, size = 0x4, scoped, tag = 'scoped memory for tpu_custom_call.1']
    #allocation8 [shape = 'u8[32768]{0}', space=vmem, size = 0x8000, scoped, tag = 'input window, operand 2, single buffered']
    #allocation9 [shape = 'u8[32768]{0}', space=vmem, size = 0x8000, scoped, tag = 'input window, operand 4, single buffered']
    #allocation10 [shape = 's32[1]{0}', space=sflag, size = 0x4, scoped, tag = 'scoped memory for tpu_custom_call.1']
    #allocation11 [shape = 'u8[8192]{0}', space=vmem, size = 0x2000, scoped, tag = 'output window, operand 0, single buffered']
    %16 = vsyncpa [#allocation4], 0
    %17 = vsyncpa [#allocation7], 0
    %18 = vsyncpa [#allocation10], 0
    %19 = vsyncpa [#allocation5], 0
    // Predicated region
    $region2: #{tpu_custom_call.1} parent=1 // pred_check
      _
    $region3: #{tpu_custom_call.1} parent=1 // pred_check_branch
      %21 = sbr.rel (0) target = $region5
    $region4: #{tpu_custom_call.1} parent=1 // pred_region
      %23 = vsyncadd [#allocation4], 0
      %s24 = sshll.u32 %s0, 4
      %s25 = int_to_ptr.hbm [resolvable:$true] %s24
      %s26 = sshll.u32 [#allocation3], 4
      %s27 = int_to_ptr.vmem [resolvable:$true] %s26
      %32 = dma.hbm_to_vmem [thread:$0]  %s25, 2048, %s27, [#allocation4], 128, 128, 8
    $region5: #{tpu_custom_call.1} parent=1 // pred_fallthru
      _
    // Predicated region
    $region6: #{tpu_custom_call.1} parent=1 // pred_check
      _
    $region7: #{tpu_custom_call.1} parent=1 // pred_check_branch
      %34 = sbr.rel (0) target = $region9
    $region8: #{tpu_custom_call.1} parent=1 // pred_region
      %36 = vsyncadd [#allocation7], 0
      %s37 = sshll.u32 %s1, 4
      %s38 = int_to_ptr.hbm [resolvable:$true] %s37
      %s39 = sshll.u32 [#allocation6], 4
      %s40 = int_to_ptr.vmem [resolvable:$true] %s39
      %45 = dma.hbm_to_vmem [thread:$0]  %s38, 256, %s40, [#allocation7], 128, 128, 8
    $region9: #{tpu_custom_call.1} parent=1 // pred_fallthru
      _
    // Predicated region
    $region10: #{tpu_custom_call.1} parent=1 // pred_check
      _
    $region11: #{tpu_custom_call.1} parent=1 // pred_check_branch
      %47 = sbr.rel (0) target = $region13
    $region12: #{tpu_custom_call.1} parent=1 // pred_region
      %49 = vsyncadd [#allocation7], 0
      %s50 = sshll.u32 %s2, 4
      %s51 = int_to_ptr.hbm [resolvable:$true] %s50
      %s52 = sshll.u32 [#allocation8], 4
      %s53 = int_to_ptr.vmem [resolvable:$true] %s52
      %58 = dma.hbm_to_vmem [thread:$0]  %s51, 1024, %s53, [#allocation7], 64, 64, 4
    $region13: #{tpu_custom_call.1} parent=1 // pred_fallthru
      _
    // Predicated region
    $region14: #{tpu_custom_call.1} parent=1 // pred_check
      _
    $region15: #{tpu_custom_call.1} parent=1 // pred_check_branch
      %60 = sbr.rel (0) target = $region17
    $region16: #{tpu_custom_call.1} parent=1 // pred_region
      _
    $region17: #{tpu_custom_call.1} parent=1 // pred_fallthru
      _
    // Predicated region
    $region18: #{tpu_custom_call.1} parent=1 // pred_check
      _
    $region19: #{tpu_custom_call.1} parent=1 // pred_check_branch
      %62 = sbr.rel (0) target = $region21
    $region20: #{tpu_custom_call.1} parent=1 // pred_region
      %64 = vsyncadd [#allocation10], 0
      %s65 = sshll.u32 %s4, 4
      %s66 = int_to_ptr.hbm [resolvable:$true] %s65
      %s67 = sshll.u32 [#allocation9], 4
      %s68 = int_to_ptr.vmem [resolvable:$true] %s67
      %73 = dma.hbm_to_vmem [thread:$0]  %s66, 1024, %s68, [#allocation10], 64, 64, 4
    $region21: #{tpu_custom_call.1} parent=1 // pred_fallthru
      _
    // Predicated region
    $region22: #{tpu_custom_call.1} parent=1 // pred_check
      _
    $region23: #{tpu_custom_call.1} parent=1 // pred_check_branch
      %75 = sbr.rel (0) target = $region25
    $region24: #{tpu_custom_call.1} parent=1 // pred_region
      _
    $region25: #{tpu_custom_call.1} parent=1 // pred_fallthru
      _
    // Predicated region
    $region26: #{tpu_custom_call.1} parent=1 // pred_check
      _
    $region27: #{tpu_custom_call.1} parent=1 // pred_check_branch
      %77 = sbr.rel (0) target = $region29
    $region28: #{tpu_custom_call.1} parent=1 // pred_region
      _
    $region29: #{tpu_custom_call.1} parent=1 // pred_fallthru
      _
    // Predicated region
    $region30: #{tpu_custom_call.1} parent=1 // pred_check
      _
    $region31: #{tpu_custom_call.1} parent=1 // pred_check_branch
      %79 = sbr.rel (0) target = $region33
    $region32: #{tpu_custom_call.1} parent=1 // pred_region
      _
    $region33: #{tpu_custom_call.1} parent=1 // pred_fallthru
      _
    // Predicated region
    $region34: #{tpu_custom_call.1} parent=1 // pred_check
      _
    $region35: #{tpu_custom_call.1} parent=1 // pred_check_branch
      %81 = sbr.rel (0) target = $region37
    $region36: #{tpu_custom_call.1} parent=1 // pred_region
      %83 = dma.done [#allocation4], 2048
    $region37: #{tpu_custom_call.1} parent=1 // pred_fallthru
      _
    // Predicated region
    $region38: #{tpu_custom_call.1} parent=1 // pred_check
      _
    $region39: #{tpu_custom_call.1} parent=1 // pred_check_branch
      %85 = sbr.rel (0) target = $region41
    $region40: #{tpu_custom_call.1} parent=1 // pred_region
      %87 = dma.done [#allocation7], 256
    $region41: #{tpu_custom_call.1} parent=1 // pred_fallthru
      _
    // Predicated region
    $region42: #{tpu_custom_call.1} parent=1 // pred_check
      _
    $region43: #{tpu_custom_call.1} parent=1 // pred_check_branch
      %89 = sbr.rel (0) target = $region45
    $region44: #{tpu_custom_call.1} parent=1 // pred_region
      %91 = dma.done [#allocation7], 1024
    $region45: #{tpu_custom_call.1} parent=1 // pred_fallthru
      _
    // Predicated region
    $region46: #{tpu_custom_call.1} parent=1 // pred_check
      _
    $region47: #{tpu_custom_call.1} parent=1 // pred_check_branch
      %93 = sbr.rel (0) target = $region49
    $region48: #{tpu_custom_call.1} parent=1 // pred_region
      %95 = dma.done [#allocation10], 1024
    $region49: #{tpu_custom_call.1} parent=1 // pred_fallthru
      _
    %v96 = vld [vmem:[#allocation3] sm:$0xff]
    %v97 = vld [vmem:[#allocation3 + $0x8] sm:$0xff]
    %v98 = vld [vmem:[#allocation3 + $0x10] sm:$0xff]
    %v99 = vld [vmem:[#allocation3 + $0x18] sm:$0xff]
    %v100 = vld [vmem:[#allocation3 + $0x20] sm:$0xff]
    %v101 = vld [vmem:[#allocation3 + $0x28] sm:$0xff]
    %v102 = vld [vmem:[#allocation3 + $0x30] sm:$0xff]
    %v103 = vld [vmem:[#allocation3 + $0x38] sm:$0xff]
    %v104 = vld [vmem:[#allocation3 + $0x40] sm:$0xff]
    %v105 = vld [vmem:[#allocation3 + $0x48] sm:$0xff]
    %v106 = vld [vmem:[#allocation3 + $0x50] sm:$0xff]
    %v107 = vld [vmem:[#allocation3 + $0x58] sm:$0xff]
    %v108 = vld [vmem:[#allocation3 + $0x60] sm:$0xff]
    %v109 = vld [vmem:[#allocation3 + $0x68] sm:$0xff]
    %v110 = vld [vmem:[#allocation3 + $0x70] sm:$0xff]
    %v111 = vld [vmem:[#allocation3 + $0x78] sm:$0xff]
    %v112 = vpack.c.bf16 %v97, %v96
    %v113 = vpack.c.bf16 %v99, %v98
    %v114 = vpack.c.bf16 %v101, %v100
    %v115 = vpack.c.bf16 %v103, %v102
    %v116 = vpack.c.bf16 %v105, %v104
    %v117 = vpack.c.bf16 %v107, %v106
    %v118 = vpack.c.bf16 %v109, %v108
    %v119 = vpack.c.bf16 %v111, %v110
    %v120 = vld [vmem:[#allocation8] sm:$0xf]
    %v121 = vld [vmem:[#allocation8 + $0x4] sm:$0xf]
    %v122 = vld [vmem:[#allocation8 + $0x8] sm:$0xf]
    %v123 = vld [vmem:[#allocation8 + $0xc] sm:$0xf]
    %v124 = vld [vmem:[#allocation8 + $0x10] sm:$0xf]
    %v125 = vld [vmem:[#allocation8 + $0x14] sm:$0xf]
    %v126 = vld [vmem:[#allocation8 + $0x18] sm:$0xf]
    %v127 = vld [vmem:[#allocation8 + $0x1c] sm:$0xf]
    %v128 = vld [vmem:[#allocation8 + $0x20] sm:$0xf]
    %v129 = vld [vmem:[#allocation8 + $0x24] sm:$0xf]
    %v130 = vld [vmem:[#allocation8 + $0x28] sm:$0xf]
    %v131 = vld [vmem:[#allocation8 + $0x2c] sm:$0xf]
    %v132 = vld [vmem:[#allocation8 + $0x30] sm:$0xf]
    %v133 = vld [vmem:[#allocation8 + $0x34] sm:$0xf]
    %v134 = vld [vmem:[#allocation8 + $0x38] sm:$0xf]
    %v135 = vld [vmem:[#allocation8 + $0x3c] sm:$0xf]
    %v136 = vld [vmem:[%s3] sm:$0x1]
    %v138 = vperm.slane %v136, 0
    %v156 = vunpack.c.l.b16 %v120
    %v157 = vunpack.c.l.b16 %v121
    %v158 = vunpack.c.l.b16 %v122
    %v159 = vunpack.c.l.b16 %v123
    %v160 = vunpack.c.l.b16 %v124
    %v161 = vunpack.c.l.b16 %v125
    %v162 = vunpack.c.l.b16 %v126
    %v163 = vunpack.c.l.b16 %v127
    %v164 = vunpack.c.l.b16 %v128
    %v165 = vunpack.c.l.b16 %v129
    %v166 = vunpack.c.l.b16 %v130
    %v167 = vunpack.c.l.b16 %v131
    %v168 = vunpack.c.l.b16 %v132
    %v169 = vunpack.c.l.b16 %v133
    %v170 = vunpack.c.l.b16 %v134
    %v171 = vunpack.c.l.b16 %v135
    %v172 = vpack.c.b16 %v157, %v156
    %v173 = vpack.c.b16 %v159, %v158
    %v174 = vpack.c.b16 %v161, %v160
    %v175 = vpack.c.b16 %v163, %v162
    %v176 = vpack.c.b16 %v165, %v164
    %v177 = vpack.c.b16 %v167, %v166
    %v178 = vpack.c.b16 %v169, %v168
    %v179 = vpack.c.b16 %v171, %v170
    %188 = vmatpush.bf16.msra.mxu0 %v179
    %189 = vmatpush.bf16.msra.mxu0 %v178
    %190 = vmatpush.bf16.msra.mxu0 %v177
    %191 = vmatpush.bf16.msra.mxu0 %v176
    %192 = vmatpush.bf16.msra.mxu0 %v175
    %193 = vmatpush.bf16.msra.mxu0 %v174
    %194 = vmatpush.bf16.msra.mxu0 %v173
    %195 = vmatpush.bf16.msra.mxu0 %v172
    %196 = vmatmul.bf16.gmra.mxu0 %v112
    %v197 = vpop.f32.mrf.mxu0
    %v198 = vadd.f32 %v138, %v197
    %v199 = vpop.f32.mrf.mxu0
    %v200 = vadd.f32 %v138, %v199
    %201 = vmatmul.bf16.gmra.mxu0 %v113
    %v202 = vpop.f32.mrf.mxu0
    %v203 = vadd.f32 %v138, %v202
    %v204 = vpop.f32.mrf.mxu0
    %v205 = vadd.f32 %v138, %v204
    %206 = vmatmul.bf16.gmra.mxu0 %v114
    %v207 = vpop.f32.mrf.mxu0
    %v208 = vadd.f32 %v138, %v207
    %v209 = vpop.f32.mrf.mxu0
    %v210 = vadd.f32 %v138, %v209
    %211 = vmatmul.bf16.gmra.mxu0 %v115
    %v212 = vpop.f32.mrf.mxu0
    %v213 = vadd.f32 %v138, %v212
    %v214 = vpop.f32.mrf.mxu0
    %v215 = vadd.f32 %v138, %v214
    %216 = vmatmul.bf16.gmra.mxu0 %v116
    %v217 = vpop.f32.mrf.mxu0
    %v218 = vadd.f32 %v138, %v217
    %v219 = vpop.f32.mrf.mxu0
    %v220 = vadd.f32 %v138, %v219
    %221 = vmatmul.bf16.gmra.mxu0 %v117
    %v222 = vpop.f32.mrf.mxu0
    %v223 = vadd.f32 %v138, %v222
    %v224 = vpop.f32.mrf.mxu0
    %v225 = vadd.f32 %v138, %v224
    %226 = vmatmul.bf16.gmra.mxu0 %v118
    %v227 = vpop.f32.mrf.mxu0
    %v228 = vadd.f32 %v138, %v227
    %v229 = vpop.f32.mrf.mxu0
    %v230 = vadd.f32 %v138, %v229
    %231 = vmatmul.bf16.gmra.mxu0 %v119
    %v232 = vpop.f32.mrf.mxu0
    %v233 = vadd.f32 %v138, %v232
    %v234 = vpop.f32.mrf.mxu0
    %v235 = vadd.f32 %v138, %v234
    %236 = vdwg.mxu0
    %v237 = vtanh.pop %v198
    %v238 = vtanh.pop %v200
    %v239 = vtanh.pop %v203
    %v240 = vtanh.pop %v205
    %v241 = vtanh.pop %v208
    %v242 = vtanh.pop %v210
    %v243 = vtanh.pop %v213
    %v244 = vtanh.pop %v215
    %v245 = vtanh.pop %v218
    %v246 = vtanh.pop %v220
    %v247 = vtanh.pop %v223
    %v248 = vtanh.pop %v225
    %v249 = vtanh.pop %v228
    %v250 = vtanh.pop %v230
    %v251 = vtanh.pop %v233
    %v252 = vtanh.pop %v235
    %v253 = vld [vmem:[#allocation6] sm:$0xff]
    %v254 = vld [vmem:[#allocation6 + $0x8] sm:$0xff]
    %v255 = vpack.c.bf16 %v254, %v253
    %v256 = vld [vmem:[#allocation9] sm:$0xf]
    %v257 = vld [vmem:[#allocation9 + $0x4] sm:$0xf]
    %v258 = vld [vmem:[#allocation9 + $0x8] sm:$0xf]
    %v259 = vld [vmem:[#allocation9 + $0xc] sm:$0xf]
    %v260 = vld [vmem:[#allocation9 + $0x10] sm:$0xf]
    %v261 = vld [vmem:[#allocation9 + $0x14] sm:$0xf]
    %v262 = vld [vmem:[#allocation9 + $0x18] sm:$0xf]
    %v263 = vld [vmem:[#allocation9 + $0x1c] sm:$0xf]
    %v264 = vld [vmem:[#allocation9 + $0x20] sm:$0xf]
    %v265 = vld [vmem:[#allocation9 + $0x24] sm:$0xf]
    %v266 = vld [vmem:[#allocation9 + $0x28] sm:$0xf]
    %v267 = vld [vmem:[#allocation9 + $0x2c] sm:$0xf]
    %v268 = vld [vmem:[#allocation9 + $0x30] sm:$0xf]
    %v269 = vld [vmem:[#allocation9 + $0x34] sm:$0xf]
    %v270 = vld [vmem:[#allocation9 + $0x38] sm:$0xf]
    %v271 = vld [vmem:[#allocation9 + $0x3c] sm:$0xf]
    %v272 = vld [vmem:[%s5] sm:$0x1]
    %v274 = vperm.slane %v272, 0
    %v292 = vunpack.c.l.b16 %v256
    %v293 = vunpack.c.l.b16 %v257
    %v294 = vunpack.c.l.b16 %v258
    %v295 = vunpack.c.l.b16 %v259
    %v296 = vunpack.c.l.b16 %v260
    %v297 = vunpack.c.l.b16 %v261
    %v298 = vunpack.c.l.b16 %v262
    %v299 = vunpack.c.l.b16 %v263
    %v300 = vunpack.c.l.b16 %v264
    %v301 = vunpack.c.l.b16 %v265
    %v302 = vunpack.c.l.b16 %v266
    %v303 = vunpack.c.l.b16 %v267
    %v304 = vunpack.c.l.b16 %v268
    %v305 = vunpack.c.l.b16 %v269
    %v306 = vunpack.c.l.b16 %v270
    %v307 = vunpack.c.l.b16 %v271
    %v308 = vpack.c.b16 %v293, %v292
    %v309 = vpack.c.b16 %v295, %v294
    %v310 = vpack.c.b16 %v297, %v296
    %v311 = vpack.c.b16 %v299, %v298
    %v312 = vpack.c.b16 %v301, %v300
    %v313 = vpack.c.b16 %v303, %v302
    %v314 = vpack.c.b16 %v305, %v304
    %v315 = vpack.c.b16 %v307, %v306
    %324 = vmatpush.bf16.msra.mxu0 %v315
    %325 = vmatpush.bf16.msra.mxu0 %v314
    %326 = vmatpush.bf16.msra.mxu0 %v313
    %327 = vmatpush.bf16.msra.mxu0 %v312
    %328 = vmatpush.bf16.msra.mxu0 %v311
    %329 = vmatpush.bf16.msra.mxu0 %v310
    %330 = vmatpush.bf16.msra.mxu0 %v309
    %331 = vmatpush.bf16.msra.mxu0 %v308
    %332 = vmatmul.bf16.gmra.mxu0 %v255
    %v333 = vpop.f32.mrf.mxu0
    %v334 = vadd.f32 %v274, %v333
    %v335 = vpop.f32.mrf.mxu0
    %v336 = vadd.f32 %v274, %v335
    %337 = vdwg.mxu0
    %v338 = vtanh.pop %v334
    %v339 = vtanh.pop %v336
    %v340 = vld [vmem:[%s6] sm:$0x1]
    %v342 = vperm.slane %v340, 0
    %v344 = vmul.f32 %v338, %v342
    %v345 = vmul.f32 %v339, %v342
    %v348 = vrot.slane %v344, 1
    %v349 = vrot.slane %v344, 2
    %v350 = vrot.slane %v344, 3
    %v351 = vrot.slane %v344, 4
    %v352 = vrot.slane %v344, 5
    %v353 = vrot.slane %v344, 6
    %v354 = vrot.slane %v344, 7
    %v355 = vrot.slane %v345, 1
    %v356 = vrot.slane %v345, 2
    %v357 = vrot.slane %v345, 3
    %v358 = vrot.slane %v345, 4
    %v359 = vrot.slane %v345, 5
    %v360 = vrot.slane %v345, 6
    %v361 = vrot.slane %v345, 7
    %v362 = vperm.slane %v344, 0
    %v363 = vperm.slane %v348, 0
    %v364 = vperm.slane %v349, 0
    %v365 = vperm.slane %v350, 0
    %v366 = vperm.slane %v351, 0
    %v367 = vperm.slane %v352, 0
    %v368 = vperm.slane %v353, 0
    %v369 = vperm.slane %v354, 0
    %v370 = vperm.slane %v345, 0
    %v371 = vperm.slane %v355, 0
    %v372 = vperm.slane %v356, 0
    %v373 = vperm.slane %v357, 0
    %v374 = vperm.slane %v358, 0
    %v375 = vperm.slane %v359, 0
    %v376 = vperm.slane %v360, 0
    %v377 = vperm.slane %v361, 0
    %v394 = vmul.f32 %v237, %v362
    %v395 = vmul.f32 %v238, %v363
    %v396 = vmul.f32 %v239, %v364
    %v397 = vmul.f32 %v240, %v365
    %v398 = vmul.f32 %v241, %v366
    %v399 = vmul.f32 %v242, %v367
    %v400 = vmul.f32 %v243, %v368
    %v401 = vmul.f32 %v244, %v369
    %v402 = vmul.f32 %v245, %v370
    %v403 = vmul.f32 %v246, %v371
    %v404 = vmul.f32 %v247, %v372
    %v405 = vmul.f32 %v248, %v373
    %v406 = vmul.f32 %v249, %v374
    %v407 = vmul.f32 %v250, %v375
    %v408 = vmul.f32 %v251, %v376
    %v409 = vmul.f32 %v252, %v377
    %410 = vadd.xlane.f32.xlu0 %v394
    %v411 = vpop.xlane.xlu0 %410
    %412 = vadd.xlane.f32.xlu0 %v395
    %v413 = vpop.xlane.xlu0 %412
    %414 = vadd.xlane.f32.xlu0 %v396
    %v415 = vpop.xlane.xlu0 %414
    %416 = vadd.xlane.f32.xlu0 %v397
    %v417 = vpop.xlane.xlu0 %416
    %418 = vadd.xlane.f32.xlu0 %v398
    %v419 = vpop.xlane.xlu0 %418
    %420 = vadd.xlane.f32.xlu0 %v399
    %v421 = vpop.xlane.xlu0 %420
    %422 = vadd.xlane.f32.xlu0 %v400
    %v423 = vpop.xlane.xlu0 %422
    %424 = vadd.xlane.f32.xlu0 %v401
    %v425 = vpop.xlane.xlu0 %424
    %426 = vadd.xlane.f32.xlu0 %v402
    %v427 = vpop.xlane.xlu0 %426
    %428 = vadd.xlane.f32.xlu0 %v403
    %v429 = vpop.xlane.xlu0 %428
    %430 = vadd.xlane.f32.xlu0 %v404
    %v431 = vpop.xlane.xlu0 %430
    %432 = vadd.xlane.f32.xlu0 %v405
    %v433 = vpop.xlane.xlu0 %432
    %434 = vadd.xlane.f32.xlu0 %v406
    %v435 = vpop.xlane.xlu0 %434
    %436 = vadd.xlane.f32.xlu0 %v407
    %v437 = vpop.xlane.xlu0 %436
    %438 = vadd.xlane.f32.xlu0 %v408
    %v439 = vpop.xlane.xlu0 %438
    %440 = vadd.xlane.f32.xlu0 %v409
    %v441 = vpop.xlane.xlu0 %440
    %s442 = sld [smem:[#allocation2]]
    %v443 = vstv %s442
    %v444 = vadd.f32 %v411, %v443
    %v445 = vadd.f32 %v413, %v443
    %v446 = vadd.f32 %v415, %v443
    %v447 = vadd.f32 %v417, %v443
    %v448 = vadd.f32 %v419, %v443
    %v449 = vadd.f32 %v421, %v443
    %v450 = vadd.f32 %v423, %v443
    %v451 = vadd.f32 %v425, %v443
    %v452 = vadd.f32 %v427, %v443
    %v453 = vadd.f32 %v429, %v443
    %v454 = vadd.f32 %v431, %v443
    %v455 = vadd.f32 %v433, %v443
    %v456 = vadd.f32 %v435, %v443
    %v457 = vadd.f32 %v437, %v443
    %v458 = vadd.f32 %v439, %v443
    %v459 = vadd.f32 %v441, %v443
    %v460 = vtanh.pop %v444
    %v461 = vtanh.pop %v445
    %v462 = vtanh.pop %v446
    %v463 = vtanh.pop %v447
    %v464 = vtanh.pop %v448
    %v465 = vtanh.pop %v449
    %v466 = vtanh.pop %v450
    %v467 = vtanh.pop %v451
    %v468 = vtanh.pop %v452
    %v469 = vtanh.pop %v453
    %v470 = vtanh.pop %v454
    %v471 = vtanh.pop %v455
    %v472 = vtanh.pop %v456
    %v473 = vtanh.pop %v457
    %v474 = vtanh.pop %v458
    %v475 = vtanh.pop %v459
    %v492 = vlaneseq
    %v493 = vand.u32 %v492, 127
    %v494 = vperm.slane %v460, %v493
    %v495 = vperm.slane %v461, %v493
    %v496 = vperm.slane %v462, %v493
    %v497 = vperm.slane %v463, %v493
    %v498 = vperm.slane %v464, %v493
    %v499 = vperm.slane %v465, %v493
    %v500 = vperm.slane %v466, %v493
    %v501 = vperm.slane %v467, %v493
    %v502 = vperm.slane %v468, %v493
    %v503 = vperm.slane %v469, %v493
    %v504 = vperm.slane %v470, %v493
    %v505 = vperm.slane %v471, %v493
    %v506 = vperm.slane %v472, %v493
    %v507 = vperm.slane %v473, %v493
    %v508 = vperm.slane %v474, %v493
    %v509 = vperm.slane %v475, %v493
    %vm510 = vcmask 1041409
    %v511 = vsel %vm510, %v495, %v494
    %vm512 = vcmask 1042434
    %v513 = vsel %vm512, %v496, %v511
    %vm514 = vcmask 1043459
    %v515 = vsel %vm514, %v497, %v513
    %vm516 = vcmask 1044484
    %v517 = vsel %vm516, %v498, %v515
    %vm518 = vcmask 1045509
    %v519 = vsel %vm518, %v499, %v517
    %vm520 = vcmask 1046534
    %v521 = vsel %vm520, %v500, %v519
    %vm522 = vcmask 1047559
    %v523 = vsel %vm522, %v501, %v521
    %v524 = vsel %vm510, %v503, %v502
    %v525 = vsel %vm512, %v504, %v524
    %v526 = vsel %vm514, %v505, %v525
    %v527 = vsel %vm516, %v506, %v526
    %v528 = vsel %vm518, %v507, %v527
    %v529 = vsel %vm520, %v508, %v528
    %v530 = vsel %vm522, %v509, %v529
    %vm533 = vcmask 64512
    %v534 = vsel %vm533, %v523, -inf
    %535 = vmax.xlane.f32.xlu0 %v534
    %v536 = vpop.xlane.xlu0 %535
    %v537 = vsel %vm533, %v530, -inf
    %538 = vmax.xlane.f32.xlu0 %v537
    %v539 = vpop.xlane.xlu0 %538
    %v542 = vperm.slane %v536, 0
    %v543 = vperm.slane %v536, 1
    %v544 = vperm.slane %v536, 2
    %v545 = vperm.slane %v536, 3
    %v546 = vperm.slane %v536, 4
    %v547 = vperm.slane %v536, 5
    %v548 = vperm.slane %v536, 6
    %v549 = vperm.slane %v536, 7
    %v550 = vperm.slane %v539, 0
    %v551 = vperm.slane %v539, 1
    %v552 = vperm.slane %v539, 2
    %v553 = vperm.slane %v539, 3
    %v554 = vperm.slane %v539, 4
    %v555 = vperm.slane %v539, 5
    %v556 = vperm.slane %v539, 6
    %v557 = vperm.slane %v539, 7
    %v574 = vsub.f32 %v460, %v542
    %v575 = vsub.f32 %v461, %v543
    %v576 = vsub.f32 %v462, %v544
    %v577 = vsub.f32 %v463, %v545
    %v578 = vsub.f32 %v464, %v546
    %v579 = vsub.f32 %v465, %v547
    %v580 = vsub.f32 %v466, %v548
    %v581 = vsub.f32 %v467, %v549
    %v582 = vsub.f32 %v468, %v550
    %v583 = vsub.f32 %v469, %v551
    %v584 = vsub.f32 %v470, %v552
    %v585 = vsub.f32 %v471, %v553
    %v586 = vsub.f32 %v472, %v554
    %v587 = vsub.f32 %v473, %v555
    %v588 = vsub.f32 %v474, %v556
    %v589 = vsub.f32 %v475, %v557
    %v590 = vmul.f32 %v574, 1.442695
    %v591 = vpow.pop %v590
    %v592 = vmul.f32 %v575, 1.442695
    %v593 = vpow.pop %v592
    %v594 = vmul.f32 %v576, 1.442695
    %v595 = vpow.pop %v594
    %v596 = vmul.f32 %v577, 1.442695
    %v597 = vpow.pop %v596
    %v598 = vmul.f32 %v578, 1.442695
    %v599 = vpow.pop %v598
    %v600 = vmul.f32 %v579, 1.442695
    %v601 = vpow.pop %v600
    %v602 = vmul.f32 %v580, 1.442695
    %v603 = vpow.pop %v602
    %v604 = vmul.f32 %v581, 1.442695
    %v605 = vpow.pop %v604
    %v606 = vmul.f32 %v582, 1.442695
    %v607 = vpow.pop %v606
    %v608 = vmul.f32 %v583, 1.442695
    %v609 = vpow.pop %v608
    %v610 = vmul.f32 %v584, 1.442695
    %v611 = vpow.pop %v610
    %v612 = vmul.f32 %v585, 1.442695
    %v613 = vpow.pop %v612
    %v614 = vmul.f32 %v586, 1.442695
    %v615 = vpow.pop %v614
    %v616 = vmul.f32 %v587, 1.442695
    %v617 = vpow.pop %v616
    %v618 = vmul.f32 %v588, 1.442695
    %v619 = vpow.pop %v618
    %v620 = vmul.f32 %v589, 1.442695
    %v621 = vpow.pop %v620
    %638 = vset.pattern.permute.xlu0 0
    %639 = vperm.xlu0 %638, %v591
    %v640 = vpop.permute.xlu0 %639
    %641 = vset.pattern.permute.xlu0 0
    %642 = vperm.xlu0 %641, %v593
    %v643 = vpop.permute.xlu0 %642
    %644 = vset.pattern.permute.xlu0 0
    %645 = vperm.xlu0 %644, %v595
    %v646 = vpop.permute.xlu0 %645
    %647 = vset.pattern.permute.xlu0 0
    %648 = vperm.xlu0 %647, %v597
    %v649 = vpop.permute.xlu0 %648
    %650 = vset.pattern.permute.xlu0 0
    %651 = vperm.xlu0 %650, %v599
    %v652 = vpop.permute.xlu0 %651
    %653 = vset.pattern.permute.xlu0 0
    %654 = vperm.xlu0 %653, %v601
    %v655 = vpop.permute.xlu0 %654
    %656 = vset.pattern.permute.xlu0 0
    %657 = vperm.xlu0 %656, %v603
    %v658 = vpop.permute.xlu0 %657
    %659 = vset.pattern.permute.xlu0 0
    %660 = vperm.xlu0 %659, %v605
    %v661 = vpop.permute.xlu0 %660
    %662 = vset.pattern.permute.xlu0 0
    %663 = vperm.xlu0 %662, %v607
    %v664 = vpop.permute.xlu0 %663
    %665 = vset.pattern.permute.xlu0 0
    %666 = vperm.xlu0 %665, %v609
    %v667 = vpop.permute.xlu0 %666
    %668 = vset.pattern.permute.xlu0 0
    %669 = vperm.xlu0 %668, %v611
    %v670 = vpop.permute.xlu0 %669
    %671 = vset.pattern.permute.xlu0 0
    %672 = vperm.xlu0 %671, %v613
    %v673 = vpop.permute.xlu0 %672
    %674 = vset.pattern.permute.xlu0 0
    %675 = vperm.xlu0 %674, %v615
    %v676 = vpop.permute.xlu0 %675
    %677 = vset.pattern.permute.xlu0 0
    %678 = vperm.xlu0 %677, %v617
    %v679 = vpop.permute.xlu0 %678
    %680 = vset.pattern.permute.xlu0 0
    %681 = vperm.xlu0 %680, %v619
    %v682 = vpop.permute.xlu0 %681
    %683 = vset.pattern.permute.xlu0 0
    %684 = vperm.xlu0 %683, %v621
    %v685 = vpop.permute.xlu0 %684
    %v686 = vperm.slane %v640, %v493
    %v687 = vperm.slane %v643, %v493
    %v688 = vperm.slane %v646, %v493
    %v689 = vperm.slane %v649, %v493
    %v690 = vperm.slane %v652, %v493
    %v691 = vperm.slane %v655, %v493
    %v692 = vperm.slane %v658, %v493
    %v693 = vperm.slane %v661, %v493
    %v694 = vperm.slane %v664, %v493
    %v695 = vperm.slane %v667, %v493
    %v696 = vperm.slane %v670, %v493
    %v697 = vperm.slane %v673, %v493
    %v698 = vperm.slane %v676, %v493
    %v699 = vperm.slane %v679, %v493
    %v700 = vperm.slane %v682, %v493
    %v701 = vperm.slane %v685, %v493
    %v702 = vsel %vm510, %v687, %v686
    %v703 = vsel %vm512, %v688, %v702
    %v704 = vsel %vm514, %v689, %v703
    %v705 = vsel %vm516, %v690, %v704
    %v706 = vsel %vm518, %v691, %v705
    %v707 = vsel %vm520, %v692, %v706
    %v708 = vsel %vm522, %v693, %v707
    %v709 = vsel %vm510, %v695, %v694
    %v710 = vsel %vm512, %v696, %v709
    %v711 = vsel %vm514, %v697, %v710
    %v712 = vsel %vm516, %v698, %v711
    %v713 = vsel %vm518, %v699, %v712
    %v714 = vsel %vm520, %v700, %v713
    %v715 = vsel %vm522, %v701, %v714
    %v718 = vsel %vm533, %v708, 0.0
    %719 = vadd.xlane.f32.xlu0 %v718
    %v720 = vpop.xlane.xlu0 %719
    %v721 = vsel %vm533, %v715, 0.0
    %722 = vadd.xlane.f32.xlu0 %v721
    %v723 = vpop.xlane.xlu0 %722
    %v724 = vrcp.pop %v720
    %v725 = vrcp.pop %v723
    %v728 = vperm.slane %v724, 0
    %v729 = vperm.slane %v724, 1
    %v730 = vperm.slane %v724, 2
    %v731 = vperm.slane %v724, 3
    %v732 = vperm.slane %v724, 4
    %v733 = vperm.slane %v724, 5
    %v734 = vperm.slane %v724, 6
    %v735 = vperm.slane %v724, 7
    %v736 = vperm.slane %v725, 0
    %v737 = vperm.slane %v725, 1
    %v738 = vperm.slane %v725, 2
    %v739 = vperm.slane %v725, 3
    %v740 = vperm.slane %v725, 4
    %v741 = vperm.slane %v725, 5
    %v742 = vperm.slane %v725, 6
    %v743 = vperm.slane %v725, 7
    %v760 = vmul.f32 %v591, %v728
    %v761 = vmul.f32 %v593, %v729
    %v762 = vmul.f32 %v595, %v730
    %v763 = vmul.f32 %v597, %v731
    %v764 = vmul.f32 %v599, %v732
    %v765 = vmul.f32 %v601, %v733
    %v766 = vmul.f32 %v603, %v734
    %v767 = vmul.f32 %v605, %v735
    %v768 = vmul.f32 %v607, %v736
    %v769 = vmul.f32 %v609, %v737
    %v770 = vmul.f32 %v611, %v738
    %v771 = vmul.f32 %v613, %v739
    %v772 = vmul.f32 %v615, %v740
    %v773 = vmul.f32 %v617, %v741
    %v774 = vmul.f32 %v619, %v742
    %v775 = vmul.f32 %v621, %v743
    %792 = vset.pattern.permute.xlu0 0
    %793 = vperm.xlu0 %792, %v760
    %v794 = vpop.permute.xlu0 %793
    %795 = vset.pattern.permute.xlu0 0
    %796 = vperm.xlu0 %795, %v761
    %v797 = vpop.permute.xlu0 %796
    %798 = vset.pattern.permute.xlu0 0
    %799 = vperm.xlu0 %798, %v762
    %v800 = vpop.permute.xlu0 %799
    %801 = vset.pattern.permute.xlu0 0
    %802 = vperm.xlu0 %801, %v763
    %v803 = vpop.permute.xlu0 %802
    %804 = vset.pattern.permute.xlu0 0
    %805 = vperm.xlu0 %804, %v764
    %v806 = vpop.permute.xlu0 %805
    %807 = vset.pattern.permute.xlu0 0
    %808 = vperm.xlu0 %807, %v765
    %v809 = vpop.permute.xlu0 %808
    %810 = vset.pattern.permute.xlu0 0
    %811 = vperm.xlu0 %810, %v766
    %v812 = vpop.permute.xlu0 %811
    %813 = vset.pattern.permute.xlu0 0
    %814 = vperm.xlu0 %813, %v767
    %v815 = vpop.permute.xlu0 %814
    %816 = vset.pattern.permute.xlu0 0
    %817 = vperm.xlu0 %816, %v768
    %v818 = vpop.permute.xlu0 %817
    %819 = vset.pattern.permute.xlu0 0
    %820 = vperm.xlu0 %819, %v769
    %v821 = vpop.permute.xlu0 %820
    %822 = vset.pattern.permute.xlu0 0
    %823 = vperm.xlu0 %822, %v770
    %v824 = vpop.permute.xlu0 %823
    %825 = vset.pattern.permute.xlu0 0
    %826 = vperm.xlu0 %825, %v771
    %v827 = vpop.permute.xlu0 %826
    %828 = vset.pattern.permute.xlu0 0
    %829 = vperm.xlu0 %828, %v772
    %v830 = vpop.permute.xlu0 %829
    %831 = vset.pattern.permute.xlu0 0
    %832 = vperm.xlu0 %831, %v773
    %v833 = vpop.permute.xlu0 %832
    %834 = vset.pattern.permute.xlu0 0
    %835 = vperm.xlu0 %834, %v774
    %v836 = vpop.permute.xlu0 %835
    %837 = vset.pattern.permute.xlu0 0
    %838 = vperm.xlu0 %837, %v775
    %v839 = vpop.permute.xlu0 %838
    %v840 = vperm.slane %v794, %v493
    %v841 = vperm.slane %v797, %v493
    %v842 = vperm.slane %v800, %v493
    %v843 = vperm.slane %v803, %v493
    %v844 = vperm.slane %v806, %v493
    %v845 = vperm.slane %v809, %v493
    %v846 = vperm.slane %v812, %v493
    %v847 = vperm.slane %v815, %v493
    %v848 = vperm.slane %v818, %v493
    %v849 = vperm.slane %v821, %v493
    %v850 = vperm.slane %v824, %v493
    %v851 = vperm.slane %v827, %v493
    %v852 = vperm.slane %v830, %v493
    %v853 = vperm.slane %v833, %v493
    %v854 = vperm.slane %v836, %v493
    %v855 = vperm.slane %v839, %v493
    %v856 = vsel %vm510, %v841, %v840
    %v857 = vsel %vm512, %v842, %v856
    %v858 = vsel %vm514, %v843, %v857
    %v859 = vsel %vm516, %v844, %v858
    %v860 = vsel %vm518, %v845, %v859
    %v861 = vsel %vm520, %v846, %v860
    %v862 = vsel %vm522, %v847, %v861
    %v863 = vsel %vm510, %v849, %v848
    %v864 = vsel %vm512, %v850, %v863
    %v865 = vsel %vm514, %v851, %v864
    %v866 = vsel %vm516, %v852, %v865
    %v867 = vsel %vm518, %v853, %v866
    %v868 = vsel %vm520, %v854, %v867
    %v869 = vsel %vm522, %v855, %v868
    %872 = vst.msk [vmem:[%s9] sm:$0xff] %vm533, %v862
    %873 = vst.msk [vmem:[%s9 + $0x8] sm:$0xff] %vm533, %v869
    %v890 = vmul.f32 %v794, %v96
    %v891 = vmul.f32 %v797, %v97
    %v892 = vmul.f32 %v800, %v98
    %v893 = vmul.f32 %v803, %v99
    %v894 = vmul.f32 %v806, %v100
    %v895 = vmul.f32 %v809, %v101
    %v896 = vmul.f32 %v812, %v102
    %v897 = vmul.f32 %v815, %v103
    %v898 = vmul.f32 %v818, %v104
    %v899 = vmul.f32 %v821, %v105
    %v900 = vmul.f32 %v824, %v106
    %v901 = vmul.f32 %v827, %v107
    %v902 = vmul.f32 %v830, %v108
    %v903 = vmul.f32 %v833, %v109
    %v904 = vmul.f32 %v836, %v110
    %v905 = vmul.f32 %v839, %v111
    %v906 = vrot.slane %v890, 4
    %v907 = vadd.f32 %v890, %v906
    %v908 = vrot.slane %v907, 2
    %v909 = vadd.f32 %v907, %v908
    %v910 = vrot.slane %v909, 1
    %v911 = vadd.f32 %v909, %v910
    %v912 = vrot.slane %v891, 4
    %v913 = vadd.f32 %v891, %v912
    %v914 = vrot.slane %v913, 2
    %v915 = vadd.f32 %v913, %v914
    %v916 = vrot.slane %v915, 1
    %v917 = vadd.f32 %v915, %v916
    %v918 = vrot.slane %v892, 4
    %v919 = vadd.f32 %v892, %v918
    %v920 = vrot.slane %v919, 2
    %v921 = vadd.f32 %v919, %v920
    %v922 = vrot.slane %v921, 1
    %v923 = vadd.f32 %v921, %v922
    %v924 = vrot.slane %v893, 4
    %v925 = vadd.f32 %v893, %v924
    %v926 = vrot.slane %v925, 2
    %v927 = vadd.f32 %v925, %v926
    %v928 = vrot.slane %v927, 1
    %v929 = vadd.f32 %v927, %v928
    %v930 = vrot.slane %v894, 4
    %v931 = vadd.f32 %v894, %v930
    %v932 = vrot.slane %v931, 2
    %v933 = vadd.f32 %v931, %v932
    %v934 = vrot.slane %v933, 1
    %v935 = vadd.f32 %v933, %v934
    %v936 = vrot.slane %v895, 4
    %v937 = vadd.f32 %v895, %v936
    %v938 = vrot.slane %v937, 2
    %v939 = vadd.f32 %v937, %v938
    %v940 = vrot.slane %v939, 1
    %v941 = vadd.f32 %v939, %v940
    %v942 = vrot.slane %v896, 4
    %v943 = vadd.f32 %v896, %v942
    %v944 = vrot.slane %v943, 2
    %v945 = vadd.f32 %v943, %v944
    %v946 = vrot.slane %v945, 1
    %v947 = vadd.f32 %v945, %v946
    %v948 = vrot.slane %v897, 4
    %v949 = vadd.f32 %v897, %v948
    %v950 = vrot.slane %v949, 2
    %v951 = vadd.f32 %v949, %v950
    %v952 = vrot.slane %v951, 1
    %v953 = vadd.f32 %v951, %v952
    %v954 = vrot.slane %v898, 4
    %v955 = vadd.f32 %v898, %v954
    %v956 = vrot.slane %v955, 2
    %v957 = vadd.f32 %v955, %v956
    %v958 = vrot.slane %v957, 1
    %v959 = vadd.f32 %v957, %v958
    %v960 = vrot.slane %v899, 4
    %v961 = vadd.f32 %v899, %v960
    %v962 = vrot.slane %v961, 2
    %v963 = vadd.f32 %v961, %v962
    %v964 = vrot.slane %v963, 1
    %v965 = vadd.f32 %v963, %v964
    %v966 = vrot.slane %v900, 4
    %v967 = vadd.f32 %v900, %v966
    %v968 = vrot.slane %v967, 2
    %v969 = vadd.f32 %v967, %v968
    %v970 = vrot.slane %v969, 1
    %v971 = vadd.f32 %v969, %v970
    %v972 = vrot.slane %v901, 4
    %v973 = vadd.f32 %v901, %v972
    %v974 = vrot.slane %v973, 2
    %v975 = vadd.f32 %v973, %v974
    %v976 = vrot.slane %v975, 1
    %v977 = vadd.f32 %v975, %v976
    %v978 = vrot.slane %v902, 4
    %v979 = vadd.f32 %v902, %v978
    %v980 = vrot.slane %v979, 2
    %v981 = vadd.f32 %v979, %v980
    %v982 = vrot.slane %v981, 1
    %v983 = vadd.f32 %v981, %v982
    %v984 = vrot.slane %v903, 4
    %v985 = vadd.f32 %v903, %v984
    %v986 = vrot.slane %v985, 2
    %v987 = vadd.f32 %v985, %v986
    %v988 = vrot.slane %v987, 1
    %v989 = vadd.f32 %v987, %v988
    %v990 = vrot.slane %v904, 4
    %v991 = vadd.f32 %v904, %v990
    %v992 = vrot.slane %v991, 2
    %v993 = vadd.f32 %v991, %v992
    %v994 = vrot.slane %v993, 1
    %v995 = vadd.f32 %v993, %v994
    %v996 = vrot.slane %v905, 4
    %v997 = vadd.f32 %v905, %v996
    %v998 = vrot.slane %v997, 2
    %v999 = vadd.f32 %v997, %v998
    %v1000 = vrot.slane %v999, 1
    %v1001 = vadd.f32 %v999, %v1000
    %v1002 = vmul.f32 %v911, %v911
    %v1003 = vmul.f32 %v917, %v917
    %v1004 = vmul.f32 %v923, %v923
    %v1005 = vmul.f32 %v929, %v929
    %v1006 = vmul.f32 %v935, %v935
    %v1007 = vmul.f32 %v941, %v941
    %v1008 = vmul.f32 %v947, %v947
    %v1009 = vmul.f32 %v953, %v953
    %v1010 = vmul.f32 %v959, %v959
    %v1011 = vmul.f32 %v965, %v965
    %v1012 = vmul.f32 %v971, %v971
    %v1013 = vmul.f32 %v977, %v977
    %v1014 = vmul.f32 %v983, %v983
    %v1015 = vmul.f32 %v989, %v989
    %v1016 = vmul.f32 %v995, %v995
    %v1017 = vmul.f32 %v1001, %v1001
    %v1034 = vsel %vm510, %v1003, %v1002
    %v1035 = vsel %vm512, %v1004, %v1034
    %v1036 = vsel %vm514, %v1005, %v1035
    %v1037 = vsel %vm516, %v1006, %v1036
    %v1038 = vsel %vm518, %v1007, %v1037
    %v1039 = vsel %vm520, %v1008, %v1038
    %v1040 = vsel %vm522, %v1009, %v1039
    %v1041 = vsel %vm510, %v1011, %v1010
    %v1042 = vsel %vm512, %v1012, %v1041
    %v1043 = vsel %vm514, %v1013, %v1042
    %v1044 = vsel %vm516, %v1014, %v1043
    %v1045 = vsel %vm518, %v1015, %v1044
    %v1046 = vsel %vm520, %v1016, %v1045
    %v1047 = vsel %vm522, %v1017, %v1046
    %1050 = vadd.xlane.f32.xlu0 %v1040
    %v1051 = vpop.xlane.xlu0 %1050
    %1052 = vadd.xlane.f32.xlu0 %v1047
    %v1053 = vpop.xlane.xlu0 %1052
    %v1054 = vrsqrt.pop %v1051
    %v1055 = vmul.f32 %v1054, %v1051
    %v1056 = vmul.f32 %v1055, %v1054
    %v1057 = vmul.f32 0.5, %v1056
    %v1058 = vsub.f32 1.5, %v1057
    %v1059 = vmul.f32 %v1054, %v1058
    %vm1060 = vweird.f32 %v1051
    %vm1061 = vweird.f32 %v1054
    %vm1062 = vmor %vm1060, %vm1061
    %v1063 = vsel %vm1062, %v1054, %v1059
    %v1064 = vrsqrt.pop %v1053
    %v1065 = vmul.f32 %v1064, %v1053
    %v1066 = vmul.f32 %v1065, %v1064
    %v1067 = vmul.f32 0.5, %v1066
    %v1068 = vsub.f32 1.5, %v1067
    %v1069 = vmul.f32 %v1064, %v1068
    %vm1070 = vweird.f32 %v1053
    %vm1071 = vweird.f32 %v1064
    %vm1072 = vmor %vm1070, %vm1071
    %v1073 = vsel %vm1072, %v1064, %v1069
    %v1076 = vrot.slane %v1063, 1
    %v1077 = vrot.slane %v1063, 2
    %v1078 = vrot.slane %v1063, 3
    %v1079 = vrot.slane %v1063, 4
    %v1080 = vrot.slane %v1063, 5
    %v1081 = vrot.slane %v1063, 6
    %v1082 = vrot.slane %v1063, 7
    %v1083 = vrot.slane %v1073, 1
    %v1084 = vrot.slane %v1073, 2
    %v1085 = vrot.slane %v1073, 3
    %v1086 = vrot.slane %v1073, 4
    %v1087 = vrot.slane %v1073, 5
    %v1088 = vrot.slane %v1073, 6
    %v1089 = vrot.slane %v1073, 7
    %v1106 = vmul.f32 %v911, %v1063
    %v1107 = vmul.f32 %v917, %v1076
    %v1108 = vmul.f32 %v923, %v1077
    %v1109 = vmul.f32 %v929, %v1078
    %v1110 = vmul.f32 %v935, %v1079
    %v1111 = vmul.f32 %v941, %v1080
    %v1112 = vmul.f32 %v947, %v1081
    %v1113 = vmul.f32 %v953, %v1082
    %v1114 = vmul.f32 %v959, %v1073
    %v1115 = vmul.f32 %v965, %v1083
    %v1116 = vmul.f32 %v971, %v1084
    %v1117 = vmul.f32 %v977, %v1085
    %v1118 = vmul.f32 %v983, %v1086
    %v1119 = vmul.f32 %v989, %v1087
    %v1120 = vmul.f32 %v995, %v1088
    %v1121 = vmul.f32 %v1001, %v1089
    %v1138 = vrot.slane %v1107, 7
    %v1139 = vsel %vm510, %v1138, %v1106
    %v1140 = vrot.slane %v1108, 6
    %v1141 = vsel %vm512, %v1140, %v1139
    %v1142 = vrot.slane %v1109, 5
    %v1143 = vsel %vm514, %v1142, %v1141
    %v1144 = vrot.slane %v1110, 4
    %v1145 = vsel %vm516, %v1144, %v1143
    %v1146 = vrot.slane %v1111, 3
    %v1147 = vsel %vm518, %v1146, %v1145
    %v1148 = vrot.slane %v1112, 2
    %v1149 = vsel %vm520, %v1148, %v1147
    %v1150 = vrot.slane %v1113, 1
    %v1151 = vsel %vm522, %v1150, %v1149
    %v1152 = vrot.slane %v1115, 7
    %v1153 = vsel %vm510, %v1152, %v1114
    %v1154 = vrot.slane %v1116, 6
    %v1155 = vsel %vm512, %v1154, %v1153
    %v1156 = vrot.slane %v1117, 5
    %v1157 = vsel %vm514, %v1156, %v1155
    %v1158 = vrot.slane %v1118, 4
    %v1159 = vsel %vm516, %v1158, %v1157
    %v1160 = vrot.slane %v1119, 3
    %v1161 = vsel %vm518, %v1160, %v1159
    %v1162 = vrot.slane %v1120, 2
    %v1163 = vsel %vm520, %v1162, %v1161
    %v1164 = vrot.slane %v1121, 1
    %v1165 = vsel %vm522, %v1164, %v1163
    %1168 = vst [vmem:[#allocation11] sm:$0xff] %v1151
    %1169 = vst [vmem:[#allocation11 + $0x8] sm:$0xff] %v1165
    // Predicated region
    $region50: #{tpu_custom_call.1} parent=1 // pred_check
      _
    $region51: #{tpu_custom_call.1} parent=1 // pred_check_branch
      %1171 = sbr.rel (0) target = $region53
    $region52: #{tpu_custom_call.1} parent=1 // pred_region
      %1173 = vsyncadd [#allocation5], 0
      %s1174 = sshll.u32 [#allocation11], 4
      %s1175 = int_to_ptr.vmem [resolvable:$true] %s1174
      %s1176 = sshll.u32 %s8, 4
      %s1177 = int_to_ptr.hbm [resolvable:$true] %s1176
      %1182 = dma.vmem_to_hbm [thread:$0]  %s1175, 256, %s1177, [#allocation5], 128, 128, 8
    $region53: #{tpu_custom_call.1} parent=1 // pred_fallthru
      _
    // Predicated region
    $region54: #{tpu_custom_call.1} parent=1 // pred_check
      _
    $region55: #{tpu_custom_call.1} parent=1 // pred_check_branch
      %1184 = sbr.rel (0) target = $region57
    $region56: #{tpu_custom_call.1} parent=1 // pred_region
      _
    $region57: #{tpu_custom_call.1} parent=1 // pred_fallthru
      _
    // Predicated region
    $region58: #{tpu_custom_call.1} parent=1 // pred_check
      _
    $region59: #{tpu_custom_call.1} parent=1 // pred_check_branch
      %1186 = sbr.rel (0) target = $region61
    $region60: #{tpu_custom_call.1} parent=1 // pred_region
      %1188 = dma.done [#allocation5], 256
    $region61: #{tpu_custom_call.1} parent=1 // pred_fallthru
      _
    // Predicated region
    $region62: #{tpu_custom_call.1} parent=1 // pred_check
      _
    $region63: #{tpu_custom_call.1} parent=1 // pred_check_branch
      %1190 = sbr.rel (0) target = $region65
    $region64: #{tpu_custom_call.1} parent=1 // pred_region
      _
    $region65: #{tpu_custom_call.1} parent=1 // pred_fallthru
      _
    %1191 = vsyncpa [#allocation4], 1
    %1192 = vsyncpa [#allocation7], 1
    %1193 = vsyncpa [#allocation10], 1
    %1194 = vsyncpa [#allocation5], 1

</llo_original>
